<compile_context>
chip_gen: v5e
topology: v5e:2x2
jax: 0.10.0
libtpu: 0.0.40
codegen_flags: <defaults>
</compile_context>

<pallas_src>
import math
import numpy as np
import jax
import jax.numpy as jnp
from jax.experimental import pallas as pl
from jax.experimental.pallas import tpu as pltpu

EPS = 1e-5
INV_SQRT2 = 1.0 / math.sqrt(2.0)
SQRT_2_OVER_PI = math.sqrt(2.0 / math.pi)


def make_double_conv_kernel(S, H, Wl_mid, Wl_out, residual, fuse1, fuse2,
                            mxu_dtype, gelu_approximate):
    """Kernel over stacked lane-folded slabs: x (S, H, W*Cin) -> y (S, H, W*Cout)."""
    M = S * H  # MXU M dimension of every matmul

    def gelu(x):
        if gelu_approximate:
            # tanh GELU runs in the otherwise-idle EUP slot (numerics differ from torch default)
            return 0.5 * x * (1.0 + jnp.tanh(SQRT_2_OVER_PI * (x + 0.044715 * x * x * x)))
        return 0.5 * x * (1.0 + jax.lax.erf(x * INV_SQRT2))  # exact erf, matches nn.GELU()

    def band_conv(xin, m_ref, Wl_dst, fused, not_top, not_bot):
        # xin: (M, Wl_src).  out[r] = P1[r] + P0[r-1]*not_top[r] + P2[r+1]*not_bot[r]
        if fused:
            # single wide matmul (M, 3*Wl_dst), then 128-aligned lane slices
            p = jnp.dot(xin, m_ref[...], preferred_element_type=jnp.float32)
            p0 = p[:, :Wl_dst]
            p1 = p[:, Wl_dst:2 * Wl_dst]
            p2 = p[:, 2 * Wl_dst:]
        else:
            p0 = jnp.dot(xin, m_ref[0], preferred_element_type=jnp.float32)
            p1 = jnp.dot(xin, m_ref[1], preferred_element_type=jnp.float32)
            p2 = jnp.dot(xin, m_ref[2], preferred_element_type=jnp.float32)
        dn = not_top * pltpu.roll(p0, shift=1, axis=0)       # p0[r-1]; zero at sample top row
        up = not_bot * pltpu.roll(p2, shift=M - 1, axis=0)   # p2[r+1]; zero at sample bottom row
        return p1 + dn + up

    def group_norm(h2, g_ref, b_ref, Wl):
        # h2: (M, Wl) f32.  GroupNorm(num_groups=1): stats per sample over its (H, Wl) slab,
        # fused single pass (sum + sum of squares).
        inv_n = 1.0 / float(H * Wl)
        h3 = h2.reshape(S, H, Wl)                             # layout-preserving (H % 8 == 0)
        s = jnp.sum(jnp.sum(h3, axis=2, keepdims=True), axis=1, keepdims=True)     # (S,1,1)
        ss = jnp.sum(jnp.sum(h3 * h3, axis=2, keepdims=True), axis=1, keepdims=True)
        mean = s * inv_n
        var = jnp.maximum(ss * inv_n - mean * mean, 0.0)
        hn = (h3 - mean) * jax.lax.rsqrt(var + EPS)
        return hn.reshape(M, Wl) * g_ref[...] + b_ref[...]    # per-lane affine

    def kernel(x_ref, m1_ref, g1_ref, b1_ref, m2_ref, g2_ref, b2_ref, out_ref):
        x = x_ref[...].reshape(M, -1).astype(jnp.float32)     # (M, W*Cin), lane-dense

        # boundary masks built ONCE and reused by both convs (JAX does not CSE iota/broadcasts)
        rmod = jax.lax.broadcasted_iota(jnp.int32, (M, 1), 0) % H
        not_top = (rmod != 0).astype(jnp.float32)             # row-1 stays inside the sample
        not_bot = (rmod != H - 1).astype(jnp.float32)         # row+1 stays inside the sample

        h1 = band_conv(x.astype(mxu_dtype), m1_ref, Wl_mid, fuse1, not_top, not_bot)
        h1 = gelu(group_norm(h1, g1_ref, b1_ref, Wl_mid))

        y = band_conv(h1.astype(mxu_dtype), m2_ref, Wl_out, fuse2, not_top, not_bot)
        y = group_norm(y, g2_ref, b2_ref, Wl_out)

        if residual:
            y = gelu(x + y)                                    # requires Cin == Cout

        out_ref[...] = y.reshape(S, H, Wl_out).astype(out_ref.dtype)   # dense lane store

    return kernel


# ----------------------------- wrapper-side layout plumbing -----------------------------
def _band_weights(w_hwio, W_img, fuse_ky):
    """Fold a (3,3,Cin,Cout) HWIO conv weight into banded matrices acting on lane-folded
    rows: the kx taps, channel contraction and W-boundary zero padding are embedded in the
    MXU K dim.  Returns (W*Cin, 3*W*Cout) if fuse_ky (ky bands concatenated on the output
    axis) else (3, W*Cin, W*Cout)."""
    kx = np.arange(3)[:, None, None]
    wi = np.arange(W_img)[None, :, None]          # input column index
    wo = np.arange(W_img)[None, None, :]          # output column index
    sel = jnp.asarray((wi == wo + kx - 1).astype(np.float32))            # (3, W, W)
    m = jnp.einsum('xab,yxio->yaibo', sel, w_hwio.astype(jnp.float32))   # (3,W,Ci,W,Co)
    Cin, Cout = w_hwio.shape[2], w_hwio.shape[3]
    m = m.reshape(3, W_img * Cin, W_img * Cout)
    if fuse_ky:
        return jnp.concatenate([m[0], m[1], m[2]], axis=-1)              # (W*Cin, 3*W*Cout)
    return m


def _tile_affine(v, W_img):
    """Per-channel affine param (C,) -> lane-folded (1, W*C)."""
    return jnp.tile(v.reshape(1, -1).astype(jnp.float32), (1, W_img))


def _pick_samples_per_block(N, H, target_rows=256):
    """Largest divisor S of N with S*H <= target_rows (MXU M rows per matmul)."""
    s = max(1, min(N, max(1, target_rows // H)))
    while N % s != 0:
        s -= 1
    return s


def double_conv_pallas(x_nhwc, w1, g1, b1, w2, g2, b2, residual=False,
                       mxu_dtype=jnp.float32, gelu_approximate=False,
                       target_rows=256):
    N, H, W, Cin = x_nhwc.shape
    Cmid = w1.shape[-1]
    Cout = w2.shape[-1]
    if residual:
        assert Cin == Cout, "residual DoubleConv requires in_channels == out_channels"

    Wl_in, Wl_mid, Wl_out = W * Cin, W * Cmid, W * Cout
    S = _pick_samples_per_block(N, H, target_rows)

    # fuse the 3 ky bands into one wide matmul only when the slices stay 128-lane-aligned
    fuse1 = (Wl_mid % 128 == 0)
    fuse2 = (Wl_out % 128 == 0)

    # lane-dense views / banded weights (free layout plumbing outside the kernel)
    x_flat = x_nhwc.reshape(N, H, Wl_in)
    m1 = _band_weights(w1, W, fuse1).astype(mxu_dtype)
    m2 = _band_weights(w2, W, fuse2).astype(mxu_dtype)
    g1t, b1t = _tile_affine(g1, W), _tile_affine(b1, W)
    g2t, b2t = _tile_affine(g2, W), _tile_affine(b2, W)

    kernel = make_double_conv_kernel(S, H, Wl_mid, Wl_out, residual, fuse1, fuse2,
                                     mxu_dtype, gelu_approximate)

    def weight_spec(m):
        if m.ndim == 2:
            return pl.BlockSpec(m.shape, lambda b: (0, 0))
        return pl.BlockSpec(m.shape, lambda b: (0, 0, 0))

    grid_spec = pltpu.PrefetchScalarGridSpec(
        num_scalar_prefetch=0,
        grid=(N // S,),
        in_specs=[
            pl.BlockSpec((S, H, Wl_in), lambda b: (b, 0, 0)),
            weight_spec(m1),
            pl.BlockSpec((1, Wl_mid), lambda b: (0, 0)),
            pl.BlockSpec((1, Wl_mid), lambda b: (0, 0)),
            weight_spec(m2),
            pl.BlockSpec((1, Wl_out), lambda b: (0, 0)),
            pl.BlockSpec((1, Wl_out), lambda b: (0, 0)),
        ],
        out_specs=pl.BlockSpec((S, H, Wl_out), lambda b: (b, 0, 0)),
    )

    y_flat = pl.pallas_call(
        kernel,
        out_shape=jax.ShapeDtypeStruct((N, H, Wl_out), x_nhwc.dtype),
        grid_spec=grid_spec,
        compiler_params=pltpu.CompilerParams(
            dimension_semantics=("parallel",),        # stacked batch blocks are independent
            # deliberate raise above v5e's 16 MiB scoped default; within v6e/v7x limits at
            # these sizes — re-derive if S / band-matrix sizes grow.
            vmem_limit_bytes=32 * 1024 * 1024),
    )(x_flat, m1, g1t, b1t, m2, g2t, b2t)

    return y_flat.reshape(N, H, W, Cout)


# ---------------- pure-JAX reference for correctness checking ----------------
def double_conv_ref(x, w1, g1, b1, w2, g2, b2, residual=False):
    def conv(h, w):
        return jax.lax.conv_general_dilated(
            h, w, window_strides=(1, 1), padding="SAME",
            dimension_numbers=("NHWC", "HWIO", "NHWC"))

    def gn(h, g, b):
        mean = jnp.mean(h, axis=(1, 2, 3), keepdims=True)
        var = jnp.mean((h - mean) ** 2, axis=(1, 2, 3), keepdims=True)
        hn = (h - mean) * jax.lax.rsqrt(var + EPS)
        return hn * g.reshape(1, 1, 1, -1) + b.reshape(1, 1, 1, -1)

    h = conv(x, w1)
    h = gn(h, g1, b1)
    h = jax.nn.gelu(h, approximate=False)
    h = conv(h, w2)
    h = gn(h, g2, b2)
    if residual:
        h = jax.nn.gelu(x + h, approximate=False)
    return h


def make_params(key, Cin, Cmid, Cout):
    k1, k2, k3, k4, k5, k6 = jax.random.split(key, 6)
    w1 = 0.1 * jax.random.normal(k1, (3, 3, Cin, Cmid), jnp.float32)
    g1 = 1.0 + 0.05 * jax.random.normal(k2, (1, Cmid), jnp.float32)
    b1 = 0.05 * jax.random.normal(k3, (1, Cmid), jnp.float32)
    w2 = 0.1 * jax.random.normal(k4, (3, 3, Cmid, Cout), jnp.float32)
    g2 = 1.0 + 0.05 * jax.random.normal(k5, (1, Cout), jnp.float32)
    b2 = 0.05 * jax.random.normal(k6, (1, Cout), jnp.float32)
    return w1, g1, b1, w2, g2, b2


if __name__ == "__main__":
    key = jax.random.PRNGKey(0)
    kx, kp1, kp2 = jax.random.split(key, 3)

    # Case 1: DoubleConv(in=4, out=8), residual=False.  PyTorch x is NCHW (2,4,16,16).
    N, H, W, Cin, Cout = 2, 16, 16, 4, 8
    x_nchw = jax.random.normal(kx, (N, Cin, H, W), jnp.float32)
    x = jnp.transpose(x_nchw, (0, 2, 3, 1))          # NHWC view for the TPU kernel
    p = make_params(kp1, Cin, Cout, Cout)

    y = double_conv_pallas(x, *p, residual=False)
    y = jax.block_until_ready(y)
    y_ref = double_conv_ref(x, *p, residual=False)
    np.testing.assert_allclose(np.asarray(y), np.asarray(y_ref), rtol=1e-3, atol=1e-3)

    # Case 2: DoubleConv(in=4, out=4, residual=True)
    p_res = make_params(kp2, Cin, Cin, Cin)
    y2 = double_conv_pallas(x, *p_res, residual=True)
    y2 = jax.block_until_ready(y2)
    y2_ref = double_conv_ref(x, *p_res, residual=True)
    np.testing.assert_allclose(np.asarray(y2), np.asarray(y2_ref), rtol=1e-3, atol=1e-3)

    print("KERNEL_OK")
</pallas_src>

<mosaic_0001>
module attributes {stable_mosaic.version = 11 : i64} {
  func.func @kernel(%arg0: i32, %arg1: memref<2x16x64xf32, #tpu.memory_space<vmem>>, %arg2: memref<64x384xf32, #tpu.memory_space<vmem>>, %arg3: memref<1x128xf32, #tpu.memory_space<vmem>>, %arg4: memref<1x128xf32, #tpu.memory_space<vmem>>, %arg5: memref<128x384xf32, #tpu.memory_space<vmem>>, %arg6: memref<1x128xf32, #tpu.memory_space<vmem>>, %arg7: memref<1x128xf32, #tpu.memory_space<vmem>>, %arg8: memref<2x16x128xf32, #tpu.memory_space<vmem>>) attributes {dimension_semantics = [#tpu.dimension_semantics<parallel>], iteration_bounds = array<i64: 1>, scalar_prefetch = 0 : i64, scratch_operands = 0 : i64, tpu.core_type = #tpu.core_type<tc>, window_params = [{transform_indices = @transform_0, window_bounds = array<i64: 2, 16, 64>}, {pipeline_mode = #tpu.pipeline_mode<synchronous>, transform_indices = @transform_1, window_bounds = array<i64: 64, 384>}, {pipeline_mode = #tpu.pipeline_mode<synchronous>, transform_indices = @transform_2, window_bounds = array<i64: 1, 128>}, {pipeline_mode = #tpu.pipeline_mode<synchronous>, transform_indices = @transform_3, window_bounds = array<i64: 1, 128>}, {pipeline_mode = #tpu.pipeline_mode<synchronous>, transform_indices = @transform_4, window_bounds = array<i64: 128, 384>}, {pipeline_mode = #tpu.pipeline_mode<synchronous>, transform_indices = @transform_5, window_bounds = array<i64: 1, 128>}, {pipeline_mode = #tpu.pipeline_mode<synchronous>, transform_indices = @transform_6, window_bounds = array<i64: 1, 128>}, {transform_indices = @transform_7, window_bounds = array<i64: 2, 16, 128>}]} {
    %c0 = arith.constant 0 : index
    %c0_0 = arith.constant 0 : index
    %c0_1 = arith.constant 0 : index
    %0 = vector.load %arg1[%c0, %c0_0, %c0_1] : memref<2x16x64xf32, #tpu.memory_space<vmem>>, vector<2x16x64xf32>
    %1 = vector.shape_cast %0 : vector<2x16x64xf32> to vector<32x64xf32>
    %2 = tpu.iota {dimensions = array<i32: 0>} : vector<32x1xi32>
    %c16_i32 = arith.constant 16 : i32
    %c0_i32 = arith.constant 0 : i32
    %3 = arith.cmpi eq, %c16_i32, %c0_i32 : i32
    %c1_i32 = arith.constant 1 : i32
    %4 = arith.select %3, %c1_i32, %c16_i32 : i32
    %5 = vector.broadcast %4 : i32 to vector<32x1xi32>
    %6 = arith.remsi %2, %5 : vector<32x1xi32>
    %c0_i32_2 = arith.constant 0 : i32
    %7 = vector.broadcast %c0_i32_2 : i32 to vector<32x1xi32>
    %8 = arith.cmpi ne, %6, %7 : vector<32x1xi32>
    %c0_i32_3 = arith.constant 0 : i32
    %9 = vector.broadcast %c0_i32_3 : i32 to vector<32x1xi32>
    %10 = arith.cmpi slt, %6, %9 : vector<32x1xi32>
    %c0_i32_4 = arith.constant 0 : i32
    %11 = arith.cmpi slt, %4, %c0_i32_4 : i32
    %12 = vector.broadcast %11 : i1 to vector<32x1xi1>
    %13 = vector.broadcast %12 : vector<32x1xi1> to vector<32x1xi1>
    %14 = arith.xori %10, %13 : vector<32x1xi1>
    %15 = arith.andi %14, %8 : vector<32x1xi1>
    %16 = vector.broadcast %4 : i32 to vector<32x1xi32>
    %17 = arith.addi %6, %16 : vector<32x1xi32>
    %18 = arith.select %15, %17, %6 : vector<32x1xi1>, vector<32x1xi32>
    %c0_i32_5 = arith.constant 0 : i32
    %19 = vector.broadcast %c0_i32_5 : i32 to vector<32x1xi32>
    %20 = arith.cmpi ne, %18, %19 : vector<32x1xi32>
    %21 = arith.extui %20 : vector<32x1xi1> to vector<32x1xi32>
    %22 = arith.sitofp %21 : vector<32x1xi32> to vector<32x1xf32>
    %c15_i32 = arith.constant 15 : i32
    %23 = vector.broadcast %c15_i32 : i32 to vector<32x1xi32>
    %24 = arith.cmpi ne, %18, %23 : vector<32x1xi32>
    %25 = arith.extui %24 : vector<32x1xi1> to vector<32x1xi32>
    %26 = arith.sitofp %25 : vector<32x1xi32> to vector<32x1xf32>
    %c0_6 = arith.constant 0 : index
    %c0_7 = arith.constant 0 : index
    %27 = vector.load %arg2[%c0_6, %c0_7] : memref<64x384xf32, #tpu.memory_space<vmem>>, vector<64x384xf32>
    %cst = arith.constant dense<0.000000e+00> : vector<32x384xf32>
    %28 = tpu.matmul %1, %27, %cst {dimension_numbers = #tpu.dot_dimension_numbers<[1], [0], [0], [1], [0, 0, 1, 1], [], []>} : vector<32x64xf32>, vector<64x384xf32>, vector<32x384xf32> -> vector<32x384xf32>
    %29 = vector.extract_strided_slice %28 {offsets = [0, 0], sizes = [32, 128], strides = [1, 1]} : vector<32x384xf32> to vector<32x128xf32>
    %30 = vector.extract_strided_slice %28 {offsets = [0, 128], sizes = [32, 128], strides = [1, 1]} : vector<32x384xf32> to vector<32x128xf32>
    %31 = vector.extract_strided_slice %28 {offsets = [0, 256], sizes = [32, 128], strides = [1, 1]} : vector<32x384xf32> to vector<32x128xf32>
    %c1_i32_8 = arith.constant 1 : i32
    %32 = tpu.dynamic_rotate %29 by %c1_i32_8 dim 0 : vector<32x128xf32>, i32 -> vector<32x128xf32>
    %33 = vector.broadcast %22 : vector<32x1xf32> to vector<32x128xf32>
    %34 = arith.mulf %33, %32 : vector<32x128xf32>
    %c31_i32 = arith.constant 31 : i32
    %35 = tpu.dynamic_rotate %31 by %c31_i32 dim 0 : vector<32x128xf32>, i32 -> vector<32x128xf32>
    %36 = vector.broadcast %26 : vector<32x1xf32> to vector<32x128xf32>
    %37 = arith.mulf %36, %35 : vector<32x128xf32>
    %38 = arith.addf %30, %34 : vector<32x128xf32>
    %39 = arith.addf %38, %37 : vector<32x128xf32>
    %40 = vector.shape_cast %39 : vector<32x128xf32> to vector<2x16x128xf32>
    %cst_9 = arith.constant dense<0.000000e+00> : vector<2x16xf32>
    %41 = vector.multi_reduction <add>, %40, %cst_9 [2] : vector<2x16x128xf32> to vector<2x16xf32>
    %42 = vector.shape_cast %41 : vector<2x16xf32> to vector<2x16x1xf32>
    %cst_10 = arith.constant dense<0.000000e+00> : vector<2x1xf32>
    %43 = vector.multi_reduction <add>, %42, %cst_10 [1] : vector<2x16x1xf32> to vector<2x1xf32>
    %44 = vector.shape_cast %43 : vector<2x1xf32> to vector<2x1x1xf32>
    %45 = arith.mulf %40, %40 : vector<2x16x128xf32>
    %cst_11 = arith.constant dense<0.000000e+00> : vector<2x16xf32>
    %46 = vector.multi_reduction <add>, %45, %cst_11 [2] : vector<2x16x128xf32> to vector<2x16xf32>
    %47 = vector.shape_cast %46 : vector<2x16xf32> to vector<2x16x1xf32>
    %cst_12 = arith.constant dense<0.000000e+00> : vector<2x1xf32>
    %48 = vector.multi_reduction <add>, %47, %cst_12 [1] : vector<2x16x1xf32> to vector<2x1xf32>
    %49 = vector.shape_cast %48 : vector<2x1xf32> to vector<2x1x1xf32>
    %cst_13 = arith.constant 4.8828125E-4 : f32
    %50 = vector.broadcast %cst_13 : f32 to vector<2x1x1xf32>
    %51 = arith.mulf %44, %50 : vector<2x1x1xf32>
    %cst_14 = arith.constant 4.8828125E-4 : f32
    %52 = vector.broadcast %cst_14 : f32 to vector<2x1x1xf32>
    %53 = arith.mulf %49, %52 : vector<2x1x1xf32>
    %54 = arith.mulf %51, %51 : vector<2x1x1xf32>
    %55 = arith.subf %53, %54 : vector<2x1x1xf32>
    %cst_15 = arith.constant 0.000000e+00 : f32
    %56 = vector.broadcast %cst_15 : f32 to vector<2x1x1xf32>
    %57 = arith.maximumf %55, %56 : vector<2x1x1xf32>
    %58 = vector.broadcast %51 : vector<2x1x1xf32> to vector<2x16x128xf32>
    %59 = arith.subf %40, %58 : vector<2x16x128xf32>
    %cst_16 = arith.constant 9.99999974E-6 : f32
    %60 = vector.broadcast %cst_16 : f32 to vector<2x1x1xf32>
    %61 = arith.addf %57, %60 : vector<2x1x1xf32>
    %62 = math.rsqrt %61 : vector<2x1x1xf32>
    %63 = vector.broadcast %62 : vector<2x1x1xf32> to vector<2x16x128xf32>
    %64 = arith.mulf %59, %63 : vector<2x16x128xf32>
    %65 = vector.shape_cast %64 : vector<2x16x128xf32> to vector<32x128xf32>
    %c0_17 = arith.constant 0 : index
    %c0_18 = arith.constant 0 : index
    %66 = vector.load %arg3[%c0_17, %c0_18] : memref<1x128xf32, #tpu.memory_space<vmem>>, vector<1x128xf32>
    %67 = vector.broadcast %66 : vector<1x128xf32> to vector<32x128xf32>
    %68 = arith.mulf %65, %67 : vector<32x128xf32>
    %c0_19 = arith.constant 0 : index
    %c0_20 = arith.constant 0 : index
    %69 = vector.load %arg4[%c0_19, %c0_20] : memref<1x128xf32, #tpu.memory_space<vmem>>, vector<1x128xf32>
    %70 = vector.broadcast %69 : vector<1x128xf32> to vector<32x128xf32>
    %71 = arith.addf %68, %70 : vector<32x128xf32>
    %cst_21 = arith.constant 5.000000e-01 : f32
    %72 = vector.broadcast %cst_21 : f32 to vector<32x128xf32>
    %73 = arith.mulf %72, %71 : vector<32x128xf32>
    %cst_22 = arith.constant 0.707106769 : f32
    %74 = vector.broadcast %cst_22 : f32 to vector<32x128xf32>
    %75 = arith.mulf %71, %74 : vector<32x128xf32>
    %76 = math.erf %75 : vector<32x128xf32>
    %cst_23 = arith.constant 1.000000e+00 : f32
    %77 = vector.broadcast %cst_23 : f32 to vector<32x128xf32>
    %78 = arith.addf %77, %76 : vector<32x128xf32>
    %79 = arith.mulf %73, %78 : vector<32x128xf32>
    %c0_24 = arith.constant 0 : index
    %c0_25 = arith.constant 0 : index
    %80 = vector.load %arg5[%c0_24, %c0_25] : memref<128x384xf32, #tpu.memory_space<vmem>>, vector<128x384xf32>
    %cst_26 = arith.constant dense<0.000000e+00> : vector<32x384xf32>
    %81 = tpu.matmul %79, %80, %cst_26 {dimension_numbers = #tpu.dot_dimension_numbers<[1], [0], [0], [1], [0, 0, 1, 1], [], []>} : vector<32x128xf32>, vector<128x384xf32>, vector<32x384xf32> -> vector<32x384xf32>
    %82 = vector.extract_strided_slice %81 {offsets = [0, 0], sizes = [32, 128], strides = [1, 1]} : vector<32x384xf32> to vector<32x128xf32>
    %83 = vector.extract_strided_slice %81 {offsets = [0, 128], sizes = [32, 128], strides = [1, 1]} : vector<32x384xf32> to vector<32x128xf32>
    %84 = vector.extract_strided_slice %81 {offsets = [0, 256], sizes = [32, 128], strides = [1, 1]} : vector<32x384xf32> to vector<32x128xf32>
    %c1_i32_27 = arith.constant 1 : i32
    %85 = tpu.dynamic_rotate %82 by %c1_i32_27 dim 0 : vector<32x128xf32>, i32 -> vector<32x128xf32>
    %86 = vector.broadcast %22 : vector<32x1xf32> to vector<32x128xf32>
    %87 = arith.mulf %86, %85 : vector<32x128xf32>
    %c31_i32_28 = arith.constant 31 : i32
    %88 = tpu.dynamic_rotate %84 by %c31_i32_28 dim 0 : vector<32x128xf32>, i32 -> vector<32x128xf32>
    %89 = vector.broadcast %26 : vector<32x1xf32> to vector<32x128xf32>
    %90 = arith.mulf %89, %88 : vector<32x128xf32>
    %91 = arith.addf %83, %87 : vector<32x128xf32>
    %92 = arith.addf %91, %90 : vector<32x128xf32>
    %93 = vector.shape_cast %92 : vector<32x128xf32> to vector<2x16x128xf32>
    %cst_29 = arith.constant dense<0.000000e+00> : vector<2x16xf32>
    %94 = vector.multi_reduction <add>, %93, %cst_29 [2] : vector<2x16x128xf32> to vector<2x16xf32>
    %95 = vector.shape_cast %94 : vector<2x16xf32> to vector<2x16x1xf32>
    %cst_30 = arith.constant dense<0.000000e+00> : vector<2x1xf32>
    %96 = vector.multi_reduction <add>, %95, %cst_30 [1] : vector<2x16x1xf32> to vector<2x1xf32>
    %97 = vector.shape_cast %96 : vector<2x1xf32> to vector<2x1x1xf32>
    %98 = arith.mulf %93, %93 : vector<2x16x128xf32>
    %cst_31 = arith.constant dense<0.000000e+00> : vector<2x16xf32>
    %99 = vector.multi_reduction <add>, %98, %cst_31 [2] : vector<2x16x128xf32> to vector<2x16xf32>
    %100 = vector.shape_cast %99 : vector<2x16xf32> to vector<2x16x1xf32>
    %cst_32 = arith.constant dense<0.000000e+00> : vector<2x1xf32>
    %101 = vector.multi_reduction <add>, %100, %cst_32 [1] : vector<2x16x1xf32> to vector<2x1xf32>
    %102 = vector.shape_cast %101 : vector<2x1xf32> to vector<2x1x1xf32>
    %cst_33 = arith.constant 4.8828125E-4 : f32
    %103 = vector.broadcast %cst_33 : f32 to vector<2x1x1xf32>
    %104 = arith.mulf %97, %103 : vector<2x1x1xf32>
    %cst_34 = arith.constant 4.8828125E-4 : f32
    %105 = vector.broadcast %cst_34 : f32 to vector<2x1x1xf32>
    %106 = arith.mulf %102, %105 : vector<2x1x1xf32>
    %107 = arith.mulf %104, %104 : vector<2x1x1xf32>
    %108 = arith.subf %106, %107 : vector<2x1x1xf32>
    %cst_35 = arith.constant 0.000000e+00 : f32
    %109 = vector.broadcast %cst_35 : f32 to vector<2x1x1xf32>
    %110 = arith.maximumf %108, %109 : vector<2x1x1xf32>
    %111 = vector.broadcast %104 : vector<2x1x1xf32> to vector<2x16x128xf32>
    %112 = arith.subf %93, %111 : vector<2x16x128xf32>
    %cst_36 = arith.constant 9.99999974E-6 : f32
    %113 = vector.broadcast %cst_36 : f32 to vector<2x1x1xf32>
    %114 = arith.addf %110, %113 : vector<2x1x1xf32>
    %115 = math.rsqrt %114 : vector<2x1x1xf32>
    %116 = vector.broadcast %115 : vector<2x1x1xf32> to vector<2x16x128xf32>
    %117 = arith.mulf %112, %116 : vector<2x16x128xf32>
    %118 = vector.shape_cast %117 : vector<2x16x128xf32> to vector<32x128xf32>
    %c0_37 = arith.constant 0 : index
    %c0_38 = arith.constant 0 : index
    %119 = vector.load %arg6[%c0_37, %c0_38] : memref<1x128xf32, #tpu.memory_space<vmem>>, vector<1x128xf32>
    %120 = vector.broadcast %119 : vector<1x128xf32> to vector<32x128xf32>
    %121 = arith.mulf %118, %120 : vector<32x128xf32>
    %c0_39 = arith.constant 0 : index
    %c0_40 = arith.constant 0 : index
    %122 = vector.load %arg7[%c0_39, %c0_40] : memref<1x128xf32, #tpu.memory_space<vmem>>, vector<1x128xf32>
    %123 = vector.broadcast %122 : vector<1x128xf32> to vector<32x128xf32>
    %124 = arith.addf %121, %123 : vector<32x128xf32>
    %125 = vector.shape_cast %124 : vector<32x128xf32> to vector<2x16x128xf32>
    %c0_41 = arith.constant 0 : index
    %c0_42 = arith.constant 0 : index
    %c0_43 = arith.constant 0 : index
    %126 = vector.load %arg8[%c0_41, %c0_42, %c0_43] : memref<2x16x128xf32, #tpu.memory_space<vmem>>, vector<2x16x128xf32>
    tpu.vector_store %arg8[%c0_41, %c0_42, %c0_43], %125 {strides = array<i32>} : memref<2x16x128xf32, #tpu.memory_space<vmem>>, vector<2x16x128xf32>,
    return
  }
  func.func @transform_0(%arg0: i32) -> (i32, i32, i32) {
    %c0_i32 = arith.constant 0 : i32
    %c0_i32_0 = arith.constant 0 : i32
    %c0_i32_1 = arith.constant 0 : i32
    return %arg0, %c0_i32, %c0_i32_0 : i32, i32, i32
  }
  func.func @transform_1(%arg0: i32) -> (i32, i32) {
    %c0_i32 = arith.constant 0 : i32
    %c0_i32_0 = arith.constant 0 : i32
    %c0_i32_1 = arith.constant 0 : i32
    return %c0_i32, %c0_i32_0 : i32, i32
  }
  func.func @transform_2(%arg0: i32) -> (i32, i32) {
    %c0_i32 = arith.constant 0 : i32
    %c0_i32_0 = arith.constant 0 : i32
    %c0_i32_1 = arith.constant 0 : i32
    return %c0_i32, %c0_i32_0 : i32, i32
  }
  func.func @transform_3(%arg0: i32) -> (i32, i32) {
    %c0_i32 = arith.constant 0 : i32
    %c0_i32_0 = arith.constant 0 : i32
    %c0_i32_1 = arith.constant 0 : i32
    return %c0_i32, %c0_i32_0 : i32, i32
  }
  func.func @transform_4(%arg0: i32) -> (i32, i32) {
    %c0_i32 = arith.constant 0 : i32
    %c0_i32_0 = arith.constant 0 : i32
    %c0_i32_1 = arith.constant 0 : i32
    return %c0_i32, %c0_i32_0 : i32, i32
  }
  func.func @transform_5(%arg0: i32) -> (i32, i32) {
    %c0_i32 = arith.constant 0 : i32
    %c0_i32_0 = arith.constant 0 : i32
    %c0_i32_1 = arith.constant 0 : i32
    return %c0_i32, %c0_i32_0 : i32, i32
  }
  func.func @transform_6(%arg0: i32) -> (i32, i32) {
    %c0_i32 = arith.constant 0 : i32
    %c0_i32_0 = arith.constant 0 : i32
    %c0_i32_1 = arith.constant 0 : i32
    return %c0_i32, %c0_i32_0 : i32, i32
  }
  func.func @transform_7(%arg0: i32) -> (i32, i32, i32) {
    %c0_i32 = arith.constant 0 : i32
    %c0_i32_0 = arith.constant 0 : i32
    %c0_i32_1 = arith.constant 0 : i32
    return %arg0, %c0_i32, %c0_i32_0 : i32, i32, i32
  }
}

</mosaic_0001>

<llo_original>
// kernel: tpu_custom_call.1
$region0: #{tpu_custom_call.1}
  #allocation0 [shape = 'u32[]', space=smem, size = 0x4, offset = 0x4, fixed_abs, tag = 'smem constant byte address 0x4 - core index']
  #allocation1 [shape = 'u32[72,128]{1,0:T(1,128)}', space=vmem, size = 0x9000, scoped, tag = 'internal scratch']
  %s0 = inlined_call_operand.hbm [shape: f32[2,16,64], index: 0, kind: input, shape index: {}]
  %s1 = inlined_call_operand.hbm [shape: f32[64,384], index: 1, kind: input, shape index: {}]
  %s2 = inlined_call_operand.vmem [shape: f32[1,128], index: 2, kind: input, shape index: {}]
  %s3 = inlined_call_operand.vmem [shape: f32[1,128], index: 3, kind: input, shape index: {}]
  %s4 = inlined_call_operand.hbm [shape: f32[128,384], index: 4, kind: input, shape index: {}]
  %s5 = inlined_call_operand.vmem [shape: f32[1,128], index: 5, kind: input, shape index: {}]
  %s6 = inlined_call_operand.vmem [shape: f32[1,128], index: 6, kind: input, shape index: {}]
  %s7 = inlined_call_operand.hbm [shape: f32[2,16,128], index: 7, kind: output, shape index: {}]
  %s8 = sld [smem:[#allocation0]]
  $region50: #{tpu_custom_call.1} parent=0
    _
  %s10 = ssub.s32 1, %s8
  %s11 = scalar_select 0, %s10, %s8
  $region1: #{tpu_custom_call.1} parent=0
    #allocation2 [shape = 'u8[16384]{0}', space=vmem, size = 0x4000, scoped, tag = 'input window, operand 0, single buffered']
    #allocation3 [shape = 's32[1]{0}', space=sflag, size = 0x4, scoped, tag = 'scoped memory for tpu_custom_call.1']
    #allocation4 [shape = 's32[1]{0}', space=sflag, size = 0x4, scoped, tag = 'scoped memory for tpu_custom_call.1']
    #allocation5 [shape = 'u8[98304]{0}', space=vmem, size = 0x18000, scoped, tag = 'input window, operand 1, single buffered']
    #allocation6 [shape = 's32[1]{0}', space=sflag, size = 0x4, scoped, tag = 'scoped memory for tpu_custom_call.1']
    #allocation7 [shape = 'u8[196608]{0}', space=vmem, size = 0x30000, scoped, tag = 'input window, operand 4, single buffered']
    #allocation8 [shape = 'u8[16384]{0}', space=vmem, size = 0x4000, scoped, tag = 'output window, operand 0, single buffered']
    %12 = vsyncpa [#allocation3], 0
    %13 = vsyncpa [#allocation6], 0
    %14 = vsyncpa [#allocation4], 0
    // Predicated region
    $region2: #{tpu_custom_call.1} parent=1 // pred_check
      _
    $region3: #{tpu_custom_call.1} parent=1 // pred_check_branch
      %16 = sbr.rel (0) target = $region5
    $region4: #{tpu_custom_call.1} parent=1 // pred_region
      %18 = vsyncadd [#allocation3], 0
      %s19 = sshll.u32 %s0, 4
      %s20 = int_to_ptr.hbm [resolvable:$true] %s19
      %s21 = sshll.u32 [#allocation2], 4
      %s22 = int_to_ptr.vmem [resolvable:$true] %s21
      %27 = dma.hbm_to_vmem [thread:$0]  %s20, 512, %s22, [#allocation3], 128, 128, 8
    $region5: #{tpu_custom_call.1} parent=1 // pred_fallthru
      _
    // Predicated region
    $region6: #{tpu_custom_call.1} parent=1 // pred_check
      _
    $region7: #{tpu_custom_call.1} parent=1 // pred_check_branch
      %29 = sbr.rel (0) target = $region9
    $region8: #{tpu_custom_call.1} parent=1 // pred_region
      %31 = vsyncadd [#allocation6], 0
      %s32 = sshll.u32 %s1, 4
      %s33 = int_to_ptr.hbm [resolvable:$true] %s32
      %s34 = sshll.u32 [#allocation5], 4
      %s35 = int_to_ptr.vmem [resolvable:$true] %s34
      %40 = dma.hbm_to_vmem [thread:$0]  %s33, 3072, %s35, [#allocation6], 384, 384, 24
    $region9: #{tpu_custom_call.1} parent=1 // pred_fallthru
      _
    // Predicated region
    $region10: #{tpu_custom_call.1} parent=1 // pred_check
      _
    $region11: #{tpu_custom_call.1} parent=1 // pred_check_branch
      %42 = sbr.rel (0) target = $region13
    $region12: #{tpu_custom_call.1} parent=1 // pred_region
      _
    $region13: #{tpu_custom_call.1} parent=1 // pred_fallthru
      _
    // Predicated region
    $region14: #{tpu_custom_call.1} parent=1 // pred_check
      _
    $region15: #{tpu_custom_call.1} parent=1 // pred_check_branch
      %44 = sbr.rel (0) target = $region17
    $region16: #{tpu_custom_call.1} parent=1 // pred_region
      _
    $region17: #{tpu_custom_call.1} parent=1 // pred_fallthru
      _
    // Predicated region
    $region18: #{tpu_custom_call.1} parent=1 // pred_check
      _
    $region19: #{tpu_custom_call.1} parent=1 // pred_check_branch
      %46 = sbr.rel (0) target = $region21
    $region20: #{tpu_custom_call.1} parent=1 // pred_region
      %48 = vsyncadd [#allocation6], 0
      %s49 = sshll.u32 %s4, 4
      %s50 = int_to_ptr.hbm [resolvable:$true] %s49
      %s51 = sshll.u32 [#allocation7], 4
      %s52 = int_to_ptr.vmem [resolvable:$true] %s51
      %57 = dma.hbm_to_vmem [thread:$0]  %s50, 6144, %s52, [#allocation6], 384, 384, 24
    $region21: #{tpu_custom_call.1} parent=1 // pred_fallthru
      _
    // Predicated region
    $region22: #{tpu_custom_call.1} parent=1 // pred_check
      _
    $region23: #{tpu_custom_call.1} parent=1 // pred_check_branch
      %59 = sbr.rel (0) target = $region25
    $region24: #{tpu_custom_call.1} parent=1 // pred_region
      _
    $region25: #{tpu_custom_call.1} parent=1 // pred_fallthru
      _
    // Predicated region
    $region26: #{tpu_custom_call.1} parent=1 // pred_check
      _
    $region27: #{tpu_custom_call.1} parent=1 // pred_check_branch
      %61 = sbr.rel (0) target = $region29
    $region28: #{tpu_custom_call.1} parent=1 // pred_region
      _
    $region29: #{tpu_custom_call.1} parent=1 // pred_fallthru
      _
    // Predicated region
    $region30: #{tpu_custom_call.1} parent=1 // pred_check
      _
    $region31: #{tpu_custom_call.1} parent=1 // pred_check_branch
      %63 = sbr.rel (0) target = $region33
    $region32: #{tpu_custom_call.1} parent=1 // pred_region
      %65 = dma.done [#allocation3], 512
    $region33: #{tpu_custom_call.1} parent=1 // pred_fallthru
      _
    // Predicated region
    $region34: #{tpu_custom_call.1} parent=1 // pred_check
      _
    $region35: #{tpu_custom_call.1} parent=1 // pred_check_branch
      %67 = sbr.rel (0) target = $region37
    $region36: #{tpu_custom_call.1} parent=1 // pred_region
      %69 = dma.done [#allocation6], 3072
    $region37: #{tpu_custom_call.1} parent=1 // pred_fallthru
      _
    // Predicated region
    $region38: #{tpu_custom_call.1} parent=1 // pred_check
      _
    $region39: #{tpu_custom_call.1} parent=1 // pred_check_branch
      %71 = sbr.rel (0) target = $region41
    $region40: #{tpu_custom_call.1} parent=1 // pred_region
      %73 = dma.done [#allocation6], 6144
    $region41: #{tpu_custom_call.1} parent=1 // pred_fallthru
      _
    %v74 = vld [vmem:[#allocation2] sm:$0xff]
    %v75 = vld [vmem:[#allocation2 + $0x8] sm:$0xff]
    %v76 = vld [vmem:[#allocation2 + $0x10] sm:$0xff]
    %v77 = vld [vmem:[#allocation2 + $0x18] sm:$0xff]
    %v78 = vlaneseq
    %v79 = vshrl.u32 %v78, 7
    %v80 = vadd.s32 %v79, 8
    %v81 = vadd.s32 %v79, 16
    %v82 = vadd.s32 %v79, 24
    %vm83 = vcmp.lt.s32.totalorder %v79, 0
    %v84 = vsub.s32 0, %v79
    %v85 = vsel %vm83, %v84, %v79
    %v86 = vshrl.u32 %v85, 4
    %v87 = vand.u32 %v85, 15
    %v88 = vsub.s32 0, %v87
    %v89 = vsel %vm83, %v88, %v87
    %vm90 = vcmp.lt.s32.totalorder %v80, 0
    %v91 = vsub.s32 0, %v80
    %v92 = vsel %vm90, %v91, %v80
    %v93 = vshrl.u32 %v92, 4
    %v94 = vand.u32 %v92, 15
    %v95 = vsub.s32 0, %v94
    %v96 = vsel %vm90, %v95, %v94
    %vm97 = vcmp.lt.s32.totalorder %v81, 0
    %v98 = vsub.s32 0, %v81
    %v99 = vsel %vm97, %v98, %v81
    %v100 = vshrl.u32 %v99, 4
    %v101 = vand.u32 %v99, 15
    %v102 = vsub.s32 0, %v101
    %v103 = vsel %vm97, %v102, %v101
    %vm104 = vcmp.lt.s32.totalorder %v82, 0
    %v105 = vsub.s32 0, %v82
    %v106 = vsel %vm104, %v105, %v82
    %v107 = vshrl.u32 %v106, 4
    %v108 = vand.u32 %v106, 15
    %v109 = vsub.s32 0, %v108
    %v110 = vsel %vm104, %v109, %v108
    %vm111 = vcmp.ne.s32.totalorder %v89, 0
    %vm112 = vcmp.ne.s32.totalorder %v96, 0
    %vm113 = vcmp.ne.s32.totalorder %v103, 0
    %vm114 = vcmp.ne.s32.totalorder %v110, 0
    %vm115 = vcmp.lt.s32.totalorder %v89, 0
    %vm116 = vcmp.lt.s32.totalorder %v96, 0
    %vm117 = vcmp.lt.s32.totalorder %v103, 0
    %vm118 = vcmp.lt.s32.totalorder %v110, 0
    %vm119 = vmand %vm115, %vm111
    %vm120 = vmand %vm116, %vm112
    %vm121 = vmand %vm117, %vm113
    %vm122 = vmand %vm118, %vm114
    %v123 = vadd.s32 %v89, 16
    %v124 = vadd.s32 %v96, 16
    %v125 = vadd.s32 %v103, 16
    %v126 = vadd.s32 %v110, 16
    %v127 = vsel %vm119, %v123, %v89
    %v128 = vsel %vm120, %v124, %v96
    %v129 = vsel %vm121, %v125, %v103
    %v130 = vsel %vm122, %v126, %v110
    %vm131 = vcmp.ne.s32.totalorder %v127, 0
    %vm132 = vcmp.ne.s32.totalorder %v128, 0
    %vm133 = vcmp.ne.s32.totalorder %v129, 0
    %vm134 = vcmp.ne.s32.totalorder %v130, 0
    %v135 = vsel %vm131, 1, 0
    %v136 = vsel %vm132, 1, 0
    %v137 = vsel %vm133, 1, 0
    %v138 = vsel %vm134, 1, 0
    %v139 = vcvt.s32.f32 %v135
    %v140 = vcvt.s32.f32 %v136
    %v141 = vcvt.s32.f32 %v137
    %v142 = vcvt.s32.f32 %v138
    %vm143 = vcmp.ne.s32.totalorder %v127, 15
    %vm144 = vcmp.ne.s32.totalorder %v128, 15
    %vm145 = vcmp.ne.s32.totalorder %v129, 15
    %vm146 = vcmp.ne.s32.totalorder %v130, 15
    %v147 = vsel %vm143, 1, 0
    %v148 = vsel %vm144, 1, 0
    %v149 = vsel %vm145, 1, 0
    %v150 = vsel %vm146, 1, 0
    %v151 = vcvt.s32.f32 %v147
    %v152 = vcvt.s32.f32 %v148
    %v153 = vcvt.s32.f32 %v149
    %v154 = vcvt.s32.f32 %v150
    %v155 = vld [vmem:[#allocation5] sm:$0xff]
    %v156 = vld [vmem:[#allocation5 + $0x8] sm:$0xff]
    %v157 = vld [vmem:[#allocation5 + $0x10] sm:$0xff]
    %v158 = vld [vmem:[#allocation5 + $0x18] sm:$0xff]
    %v159 = vld [vmem:[#allocation5 + $0x20] sm:$0xff]
    %v160 = vld [vmem:[#allocation5 + $0x28] sm:$0xff]
    %v161 = vld [vmem:[#allocation5 + $0x30] sm:$0xff]
    %v162 = vld [vmem:[#allocation5 + $0x38] sm:$0xff]
    %v163 = vld [vmem:[#allocation5 + $0x40] sm:$0xff]
    %v164 = vld [vmem:[#allocation5 + $0x48] sm:$0xff]
    %v165 = vld [vmem:[#allocation5 + $0x50] sm:$0xff]
    %v166 = vld [vmem:[#allocation5 + $0x58] sm:$0xff]
    %v167 = vld [vmem:[#allocation5 + $0x60] sm:$0xff]
    %v168 = vld [vmem:[#allocation5 + $0x68] sm:$0xff]
    %v169 = vld [vmem:[#allocation5 + $0x70] sm:$0xff]
    %v170 = vld [vmem:[#allocation5 + $0x78] sm:$0xff]
    %v171 = vld [vmem:[#allocation5 + $0x80] sm:$0xff]
    %v172 = vld [vmem:[#allocation5 + $0x88] sm:$0xff]
    %v173 = vld [vmem:[#allocation5 + $0x90] sm:$0xff]
    %v174 = vld [vmem:[#allocation5 + $0x98] sm:$0xff]
    %v175 = vld [vmem:[#allocation5 + $0xa0] sm:$0xff]
    %v176 = vld [vmem:[#allocation5 + $0xa8] sm:$0xff]
    %v177 = vld [vmem:[#allocation5 + $0xb0] sm:$0xff]
    %v178 = vld [vmem:[#allocation5 + $0xb8] sm:$0xff]
    %vm179 = vcmask 523264
    %v181 = vsel %vm179, %v74, 0
    %v184 = vsel %vm179, %v75, 0
    %v187 = vsel %vm179, %v76, 0
    %v190 = vsel %vm179, %v77, 0
    %192 = vmatpush.msra.mxu0 0.0
    %193 = vmatpush.msra.mxu0 0.0
    %194 = vmatpush.msra.mxu0 0.0
    %195 = vmatpush.msra.mxu0 0.0
    %196 = vmatpush.msra.mxu0 0.0
    %197 = vmatpush.msra.mxu0 0.0
    %198 = vmatpush.msra.mxu0 0.0
    %199 = vmatpush.msra.mxu0 0.0
    %200 = vmatpush.msra.mxu0 %v176
    %201 = vmatpush.msra.mxu0 %v173
    %202 = vmatpush.msra.mxu0 %v170
    %203 = vmatpush.msra.mxu0 %v167
    %204 = vmatpush.msra.mxu0 %v164
    %205 = vmatpush.msra.mxu0 %v161
    %206 = vmatpush.msra.mxu0 %v158
    %207 = vmatpush.msra.mxu0 %v155
    %208 = vmatmul.f32.gmra.mxu0 %v181
    %v209 = vpop.f32.mrf.mxu0
    %v210 = vadd.f32 0.0, %v209
    %211 = vmatmul.f32.gmra.mxu0 %v184
    %v212 = vpop.f32.mrf.mxu0
    %v213 = vadd.f32 0.0, %v212
    %214 = vmatmul.f32.gmra.mxu0 %v187
    %v215 = vpop.f32.mrf.mxu0
    %v216 = vadd.f32 0.0, %v215
    %217 = vmatmul.f32.gmra.mxu0 %v190
    %v218 = vpop.f32.mrf.mxu0
    %v219 = vadd.f32 0.0, %v218
    %220 = vdwg.mxu0
    %221 = vmatpush.msra.mxu0 0.0
    %222 = vmatpush.msra.mxu0 0.0
    %223 = vmatpush.msra.mxu0 0.0
    %224 = vmatpush.msra.mxu0 0.0
    %225 = vmatpush.msra.mxu0 0.0
    %226 = vmatpush.msra.mxu0 0.0
    %227 = vmatpush.msra.mxu0 0.0
    %228 = vmatpush.msra.mxu0 0.0
    %229 = vmatpush.msra.mxu0 %v177
    %230 = vmatpush.msra.mxu0 %v174
    %231 = vmatpush.msra.mxu0 %v171
    %232 = vmatpush.msra.mxu0 %v168
    %233 = vmatpush.msra.mxu0 %v165
    %234 = vmatpush.msra.mxu0 %v162
    %235 = vmatpush.msra.mxu0 %v159
    %236 = vmatpush.msra.mxu0 %v156
    %237 = vmatmul.f32.gmra.mxu0 %v181
    %v238 = vpop.f32.mrf.mxu0
    %v239 = vadd.f32 0.0, %v238
    %240 = vmatmul.f32.gmra.mxu0 %v184
    %v241 = vpop.f32.mrf.mxu0
    %v242 = vadd.f32 0.0, %v241
    %243 = vmatmul.f32.gmra.mxu0 %v187
    %v244 = vpop.f32.mrf.mxu0
    %v245 = vadd.f32 0.0, %v244
    %246 = vmatmul.f32.gmra.mxu0 %v190
    %v247 = vpop.f32.mrf.mxu0
    %v248 = vadd.f32 0.0, %v247
    %249 = vdwg.mxu0
    %250 = vmatpush.msra.mxu0 0.0
    %251 = vmatpush.msra.mxu0 0.0
    %252 = vmatpush.msra.mxu0 0.0
    %253 = vmatpush.msra.mxu0 0.0
    %254 = vmatpush.msra.mxu0 0.0
    %255 = vmatpush.msra.mxu0 0.0
    %256 = vmatpush.msra.mxu0 0.0
    %257 = vmatpush.msra.mxu0 0.0
    %258 = vmatpush.msra.mxu0 %v178
    %259 = vmatpush.msra.mxu0 %v175
    %260 = vmatpush.msra.mxu0 %v172
    %261 = vmatpush.msra.mxu0 %v169
    %262 = vmatpush.msra.mxu0 %v166
    %263 = vmatpush.msra.mxu0 %v163
    %264 = vmatpush.msra.mxu0 %v160
    %265 = vmatpush.msra.mxu0 %v157
    %266 = vmatmul.f32.gmra.mxu0 %v181
    %v267 = vpop.f32.mrf.mxu0
    %v268 = vadd.f32 0.0, %v267
    %269 = vmatmul.f32.gmra.mxu0 %v184
    %v270 = vpop.f32.mrf.mxu0
    %v271 = vadd.f32 0.0, %v270
    %272 = vmatmul.f32.gmra.mxu0 %v187
    %v273 = vpop.f32.mrf.mxu0
    %v274 = vadd.f32 0.0, %v273
    %275 = vmatmul.f32.gmra.mxu0 %v190
    %v276 = vpop.f32.mrf.mxu0
    %v277 = vadd.f32 0.0, %v276
    %278 = vdwg.mxu0
    %v279 = vrot.slane %v210, 7
    %v280 = vrot.slane %v213, 7
    %v281 = vrot.slane %v216, 7
    %v282 = vrot.slane %v219, 7
    %vm283 = vcmp.lt.s32.totalorder %v79, 1
    %v284 = vsel %vm283, %v281, %v282
    %v285 = vsel %vm283, %v280, %v281
    %v286 = vsel %vm283, %v279, %v280
    %v287 = vsel %vm283, %v282, %v279
    %v288 = vmul.f32 %v139, %v287
    %v289 = vmul.f32 %v140, %v286
    %v290 = vmul.f32 %v141, %v285
    %v291 = vmul.f32 %v142, %v284
    %v292 = vrot.slane %v268, 1
    %v293 = vrot.slane %v271, 1
    %v294 = vrot.slane %v274, 1
    %v295 = vrot.slane %v277, 1
    %vm296 = vcmp.lt.s32.totalorder %v79, 7
    %v297 = vsel %vm296, %v294, %v295
    %v298 = vsel %vm296, %v293, %v294
    %v299 = vsel %vm296, %v292, %v293
    %v300 = vsel %vm296, %v295, %v292
    %v301 = vmul.f32 %v151, %v299
    %v302 = vmul.f32 %v152, %v298
    %v303 = vmul.f32 %v153, %v297
    %v304 = vmul.f32 %v154, %v300
    %v305 = vadd.f32 %v239, %v288
    %v306 = vadd.f32 %v242, %v289
    %v307 = vadd.f32 %v245, %v290
    %v308 = vadd.f32 %v248, %v291
    %v309 = vadd.f32 %v305, %v301
    %v310 = vadd.f32 %v306, %v302
    %v311 = vadd.f32 %v307, %v303
    %v312 = vadd.f32 %v308, %v304
    %313 = vadd.xlane.f32.xlu0 %v309
    %v314 = vpop.xlane.xlu0 %313
    %315 = vadd.xlane.f32.xlu0 %v310
    %v316 = vpop.xlane.xlu0 %315
    %317 = vadd.xlane.f32.xlu0 %v311
    %v318 = vpop.xlane.xlu0 %317
    %319 = vadd.xlane.f32.xlu0 %v312
    %v320 = vpop.xlane.xlu0 %319
    %v321 = vadd.f32 %v314, %v316
    %v322 = vrot.slane %v321, 4
    %v323 = vadd.f32 %v321, %v322
    %v324 = vrot.slane %v323, 2
    %v325 = vadd.f32 %v323, %v324
    %v326 = vrot.slane %v325, 1
    %v327 = vadd.f32 %v325, %v326
    %v328 = vadd.f32 %v318, %v320
    %v329 = vrot.slane %v328, 4
    %v330 = vadd.f32 %v328, %v329
    %v331 = vrot.slane %v330, 2
    %v332 = vadd.f32 %v330, %v331
    %v333 = vrot.slane %v332, 1
    %v334 = vadd.f32 %v332, %v333
    %v335 = vmul.f32 %v309, %v309
    %v336 = vmul.f32 %v310, %v310
    %v337 = vmul.f32 %v311, %v311
    %v338 = vmul.f32 %v312, %v312
    %339 = vadd.xlane.f32.xlu0 %v335
    %v340 = vpop.xlane.xlu0 %339
    %341 = vadd.xlane.f32.xlu0 %v336
    %v342 = vpop.xlane.xlu0 %341
    %343 = vadd.xlane.f32.xlu0 %v337
    %v344 = vpop.xlane.xlu0 %343
    %345 = vadd.xlane.f32.xlu0 %v338
    %v346 = vpop.xlane.xlu0 %345
    %v347 = vadd.f32 %v340, %v342
    %v348 = vrot.slane %v347, 4
    %v349 = vadd.f32 %v347, %v348
    %v350 = vrot.slane %v349, 2
    %v351 = vadd.f32 %v349, %v350
    %v352 = vrot.slane %v351, 1
    %v353 = vadd.f32 %v351, %v352
    %v354 = vadd.f32 %v344, %v346
    %v355 = vrot.slane %v354, 4
    %v356 = vadd.f32 %v354, %v355
    %v357 = vrot.slane %v356, 2
    %v358 = vadd.f32 %v356, %v357
    %v359 = vrot.slane %v358, 1
    %v360 = vadd.f32 %v358, %v359
    %v361 = vmul.f32 %v327, 0.00048828125
    %v362 = vmul.f32 %v334, 0.00048828125
    %v363 = vmul.f32 %v353, 0.00048828125
    %v364 = vmul.f32 %v360, 0.00048828125
    %v365 = vmul.f32 %v361, %v361
    %v366 = vmul.f32 %v362, %v362
    %v367 = vsub.f32 %v363, %v365
    %v368 = vsub.f32 %v364, %v366
    %v369 = vmax.f32 %v367, 0.0
    %v370 = vmax.f32 %v368, 0.0
    %v371 = vsub.f32 %v309, %v361
    %v372 = vsub.f32 %v310, %v361
    %v373 = vsub.f32 %v311, %v362
    %v374 = vsub.f32 %v312, %v362
    %v375 = vadd.f32 %v369, 1e-05
    %v376 = vadd.f32 %v370, 1e-05
    %v377 = vrsqrt.pop %v375
    %v378 = vmul.f32 %v377, %v375
    %v379 = vmul.f32 %v378, %v377
    %v380 = vmul.f32 0.5, %v379
    %v381 = vsub.f32 1.5, %v380
    %v382 = vmul.f32 %v377, %v381
    %vm383 = vweird.f32 %v375
    %vm384 = vweird.f32 %v377
    %vm385 = vmor %vm383, %vm384
    %v386 = vsel %vm385, %v377, %v382
    %v387 = vrsqrt.pop %v376
    %v388 = vmul.f32 %v387, %v376
    %v389 = vmul.f32 %v388, %v387
    %v390 = vmul.f32 0.5, %v389
    %v391 = vsub.f32 1.5, %v390
    %v392 = vmul.f32 %v387, %v391
    %vm393 = vweird.f32 %v376
    %vm394 = vweird.f32 %v387
    %vm395 = vmor %vm393, %vm394
    %v396 = vsel %vm395, %v387, %v392
    %v397 = vmul.f32 %v371, %v386
    %v398 = vmul.f32 %v372, %v386
    %v399 = vmul.f32 %v373, %v396
    %v400 = vmul.f32 %v374, %v396
    %v401 = vld [vmem:[%s2] sm:$0x1]
    %v403 = vperm.slane %v401, 0
    %v405 = vmul.f32 %v397, %v403
    %v406 = vmul.f32 %v398, %v403
    %v407 = vmul.f32 %v399, %v403
    %v408 = vmul.f32 %v400, %v403
    %v409 = vld [vmem:[%s3] sm:$0x1]
    %v411 = vperm.slane %v409, 0
    %v413 = vadd.f32 %v405, %v411
    %v414 = vadd.f32 %v406, %v411
    %v415 = vadd.f32 %v407, %v411
    %v416 = vadd.f32 %v408, %v411
    %v417 = vmul.f32 %v413, 0.5
    %v418 = vmul.f32 %v414, 0.5
    %v419 = vmul.f32 %v415, 0.5
    %v420 = vmul.f32 %v416, 0.5
    %v421 = vmul.f32 %v413, 0.70710677
    %v422 = vmul.f32 %v414, 0.70710677
    %v423 = vmul.f32 %v415, 0.70710677
    %v424 = vmul.f32 %v416, 0.70710677
    %v425 = vmul.f32 %v421, %v421
    %v426 = vmin.f32 16.0, %v425
    %v427 = vmul.f32 %v426, 2.1237322e-06
    %v428 = vadd.f32 %v427, 0.00028619796
    %v429 = vmul.f32 %v426, %v428
    %v430 = vadd.f32 %v429, 0.0036580483
    %v431 = vmul.f32 %v426, %v430
    %v432 = vadd.f32 %v431, 0.05243302
    %v433 = vmul.f32 %v426, %v432
    %v434 = vadd.f32 %v433, 0.18741608
    %v435 = vmul.f32 %v426, %v434
    %v436 = vadd.f32 %v435, 1.1283791
    %v437 = vmul.f32 %v421, %v436
    %v438 = vmul.f32 %v426, 3.8918573e-05
    %v439 = vadd.f32 %v438, 0.001143296
    %v440 = vmul.f32 %v426, %v439
    %v441 = vadd.f32 %v440, 0.014752088
    %v442 = vmul.f32 %v426, %v441
    %v443 = vadd.f32 %v442, 0.112945676
    %v444 = vmul.f32 %v426, %v443
    %v445 = vadd.f32 %v444, 0.4994258
    %v446 = vmul.f32 %v426, %v445
    %v447 = vadd.f32 %v446, 1.0
    %v448 = vrcp.pop %v447
    %v449 = vmul.f32 %v447, %v448
    %v450 = vsub.f32 1.0, %v449
    %v451 = vmul.f32 %v448, %v450
    %v452 = vadd.f32 %v448, %v451
    %vm453 = vweird.f32 %v447
    %vm454 = vweird.f32 %v448
    %vm455 = vmor %vm453, %vm454
    %v456 = vsel %vm455, %v448, %v452
    %v457 = vand.u32 2147483647, %v447
    %vm458 = vcmp.eq.f32.partialorder %v457, 8.507059e+37
    %v459 = vand.u32 %v447, 2147483648
    %v460 = vor.u32 1.1754944e-38, %v459
    %v461 = vsel %vm458, %v460, %v456
    %v462 = vmul.f32 %v437, %v461
    %v463 = vmin.f32 %v462, 1.0
    %v464 = vmax.f32 %v463, -1.0
    %v465 = vmul.f32 %v422, %v422
    %v466 = vmin.f32 16.0, %v465
    %v467 = vmul.f32 %v466, 2.1237322e-06
    %v468 = vadd.f32 %v467, 0.00028619796
    %v469 = vmul.f32 %v466, %v468
    %v470 = vadd.f32 %v469, 0.0036580483
    %v471 = vmul.f32 %v466, %v470
    %v472 = vadd.f32 %v471, 0.05243302
    %v473 = vmul.f32 %v466, %v472
    %v474 = vadd.f32 %v473, 0.18741608
    %v475 = vmul.f32 %v466, %v474
    %v476 = vadd.f32 %v475, 1.1283791
    %v477 = vmul.f32 %v422, %v476
    %v478 = vmul.f32 %v466, 3.8918573e-05
    %v479 = vadd.f32 %v478, 0.001143296
    %v480 = vmul.f32 %v466, %v479
    %v481 = vadd.f32 %v480, 0.014752088
    %v482 = vmul.f32 %v466, %v481
    %v483 = vadd.f32 %v482, 0.112945676
    %v484 = vmul.f32 %v466, %v483
    %v485 = vadd.f32 %v484, 0.4994258
    %v486 = vmul.f32 %v466, %v485
    %v487 = vadd.f32 %v486, 1.0
    %v488 = vrcp.pop %v487
    %v489 = vmul.f32 %v487, %v488
    %v490 = vsub.f32 1.0, %v489
    %v491 = vmul.f32 %v488, %v490
    %v492 = vadd.f32 %v488, %v491
    %vm493 = vweird.f32 %v487
    %vm494 = vweird.f32 %v488
    %vm495 = vmor %vm493, %vm494
    %v496 = vsel %vm495, %v488, %v492
    %v497 = vand.u32 2147483647, %v487
    %vm498 = vcmp.eq.f32.partialorder %v497, 8.507059e+37
    %v499 = vand.u32 %v487, 2147483648
    %v500 = vor.u32 1.1754944e-38, %v499
    %v501 = vsel %vm498, %v500, %v496
    %v502 = vmul.f32 %v477, %v501
    %v503 = vmin.f32 %v502, 1.0
    %v504 = vmax.f32 %v503, -1.0
    %v505 = vmul.f32 %v423, %v423
    %v506 = vmin.f32 16.0, %v505
    %v507 = vmul.f32 %v506, 2.1237322e-06
    %v508 = vadd.f32 %v507, 0.00028619796
    %v509 = vmul.f32 %v506, %v508
    %v510 = vadd.f32 %v509, 0.0036580483
    %v511 = vmul.f32 %v506, %v510
    %v512 = vadd.f32 %v511, 0.05243302
    %v513 = vmul.f32 %v506, %v512
    %v514 = vadd.f32 %v513, 0.18741608
    %v515 = vmul.f32 %v506, %v514
    %v516 = vadd.f32 %v515, 1.1283791
    %v517 = vmul.f32 %v423, %v516
    %v518 = vmul.f32 %v506, 3.8918573e-05
    %v519 = vadd.f32 %v518, 0.001143296
    %v520 = vmul.f32 %v506, %v519
    %v521 = vadd.f32 %v520, 0.014752088
    %v522 = vmul.f32 %v506, %v521
    %v523 = vadd.f32 %v522, 0.112945676
    %v524 = vmul.f32 %v506, %v523
    %v525 = vadd.f32 %v524, 0.4994258
    %v526 = vmul.f32 %v506, %v525
    %v527 = vadd.f32 %v526, 1.0
    %v528 = vrcp.pop %v527
    %v529 = vmul.f32 %v527, %v528
    %v530 = vsub.f32 1.0, %v529
    %v531 = vmul.f32 %v528, %v530
    %v532 = vadd.f32 %v528, %v531
    %vm533 = vweird.f32 %v527
    %vm534 = vweird.f32 %v528
    %vm535 = vmor %vm533, %vm534
    %v536 = vsel %vm535, %v528, %v532
    %v537 = vand.u32 2147483647, %v527
    %vm538 = vcmp.eq.f32.partialorder %v537, 8.507059e+37
    %v539 = vand.u32 %v527, 2147483648
    %v540 = vor.u32 1.1754944e-38, %v539
    %v541 = vsel %vm538, %v540, %v536
    %v542 = vmul.f32 %v517, %v541
    %v543 = vmin.f32 %v542, 1.0
    %v544 = vmax.f32 %v543, -1.0
    %v545 = vmul.f32 %v424, %v424
    %v546 = vmin.f32 16.0, %v545
    %v547 = vmul.f32 %v546, 2.1237322e-06
    %v548 = vadd.f32 %v547, 0.00028619796
    %v549 = vmul.f32 %v546, %v548
    %v550 = vadd.f32 %v549, 0.0036580483
    %v551 = vmul.f32 %v546, %v550
    %v552 = vadd.f32 %v551, 0.05243302
    %v553 = vmul.f32 %v546, %v552
    %v554 = vadd.f32 %v553, 0.18741608
    %v555 = vmul.f32 %v546, %v554
    %v556 = vadd.f32 %v555, 1.1283791
    %v557 = vmul.f32 %v424, %v556
    %v558 = vmul.f32 %v546, 3.8918573e-05
    %v559 = vadd.f32 %v558, 0.001143296
    %v560 = vmul.f32 %v546, %v559
    %v561 = vadd.f32 %v560, 0.014752088
    %v562 = vmul.f32 %v546, %v561
    %v563 = vadd.f32 %v562, 0.112945676
    %v564 = vmul.f32 %v546, %v563
    %v565 = vadd.f32 %v564, 0.4994258
    %v566 = vmul.f32 %v546, %v565
    %v567 = vadd.f32 %v566, 1.0
    %v568 = vrcp.pop %v567
    %v569 = vmul.f32 %v567, %v568
    %v570 = vsub.f32 1.0, %v569
    %v571 = vmul.f32 %v568, %v570
    %v572 = vadd.f32 %v568, %v571
    %vm573 = vweird.f32 %v567
    %vm574 = vweird.f32 %v568
    %vm575 = vmor %vm573, %vm574
    %v576 = vsel %vm575, %v568, %v572
    %v577 = vand.u32 2147483647, %v567
    %vm578 = vcmp.eq.f32.partialorder %v577, 8.507059e+37
    %v579 = vand.u32 %v567, 2147483648
    %v580 = vor.u32 1.1754944e-38, %v579
    %v581 = vsel %vm578, %v580, %v576
    %v582 = vmul.f32 %v557, %v581
    %v583 = vmin.f32 %v582, 1.0
    %v584 = vmax.f32 %v583, -1.0
    %v585 = vadd.f32 %v464, 1.0
    %v586 = vadd.f32 %v504, 1.0
    %v587 = vadd.f32 %v544, 1.0
    %v588 = vadd.f32 %v584, 1.0
    %v589 = vmul.f32 %v417, %v585
    %v590 = vmul.f32 %v418, %v586
    %v591 = vmul.f32 %v419, %v587
    %v592 = vmul.f32 %v420, %v588
    %v593 = vld [vmem:[#allocation7] sm:$0xff]
    %v594 = vld [vmem:[#allocation7 + $0x8] sm:$0xff]
    %v595 = vld [vmem:[#allocation7 + $0x10] sm:$0xff]
    %v596 = vld [vmem:[#allocation7 + $0x18] sm:$0xff]
    %v597 = vld [vmem:[#allocation7 + $0x20] sm:$0xff]
    %v598 = vld [vmem:[#allocation7 + $0x28] sm:$0xff]
    %v599 = vld [vmem:[#allocation7 + $0x30] sm:$0xff]
    %v600 = vld [vmem:[#allocation7 + $0x38] sm:$0xff]
    %v601 = vld [vmem:[#allocation7 + $0x40] sm:$0xff]
    %v602 = vld [vmem:[#allocation7 + $0x48] sm:$0xff]
    %v603 = vld [vmem:[#allocation7 + $0x50] sm:$0xff]
    %v604 = vld [vmem:[#allocation7 + $0x58] sm:$0xff]
    %v605 = vld [vmem:[#allocation7 + $0x60] sm:$0xff]
    %v606 = vld [vmem:[#allocation7 + $0x68] sm:$0xff]
    %v607 = vld [vmem:[#allocation7 + $0x70] sm:$0xff]
    %v608 = vld [vmem:[#allocation7 + $0x78] sm:$0xff]
    %v609 = vld [vmem:[#allocation7 + $0x80] sm:$0xff]
    %v610 = vld [vmem:[#allocation7 + $0x88] sm:$0xff]
    %v611 = vld [vmem:[#allocation7 + $0x90] sm:$0xff]
    %v612 = vld [vmem:[#allocation7 + $0x98] sm:$0xff]
    %v613 = vld [vmem:[#allocation7 + $0xa0] sm:$0xff]
    %v614 = vld [vmem:[#allocation7 + $0xa8] sm:$0xff]
    %v615 = vld [vmem:[#allocation7 + $0xb0] sm:$0xff]
    %v616 = vld [vmem:[#allocation7 + $0xb8] sm:$0xff]
    %v617 = vld [vmem:[#allocation7 + $0xc0] sm:$0xff]
    %v618 = vld [vmem:[#allocation7 + $0xc8] sm:$0xff]
    %v619 = vld [vmem:[#allocation7 + $0xd0] sm:$0xff]
    %v620 = vld [vmem:[#allocation7 + $0xd8] sm:$0xff]
    %v621 = vld [vmem:[#allocation7 + $0xe0] sm:$0xff]
    %v622 = vld [vmem:[#allocation7 + $0xe8] sm:$0xff]
    %v623 = vld [vmem:[#allocation7 + $0xf0] sm:$0xff]
    %v624 = vld [vmem:[#allocation7 + $0xf8] sm:$0xff]
    %v625 = vld [vmem:[#allocation7 + $0x100] sm:$0xff]
    %v626 = vld [vmem:[#allocation7 + $0x108] sm:$0xff]
    %v627 = vld [vmem:[#allocation7 + $0x110] sm:$0xff]
    %v628 = vld [vmem:[#allocation7 + $0x118] sm:$0xff]
    %v629 = vld [vmem:[#allocation7 + $0x120] sm:$0xff]
    %v630 = vld [vmem:[#allocation7 + $0x128] sm:$0xff]
    %v631 = vld [vmem:[#allocation7 + $0x130] sm:$0xff]
    %v632 = vld [vmem:[#allocation7 + $0x138] sm:$0xff]
    %v633 = vld [vmem:[#allocation7 + $0x140] sm:$0xff]
    %v634 = vld [vmem:[#allocation7 + $0x148] sm:$0xff]
    %v635 = vld [vmem:[#allocation7 + $0x150] sm:$0xff]
    %v636 = vld [vmem:[#allocation7 + $0x158] sm:$0xff]
    %v637 = vld [vmem:[#allocation7 + $0x160] sm:$0xff]
    %v638 = vld [vmem:[#allocation7 + $0x168] sm:$0xff]
    %v639 = vld [vmem:[#allocation7 + $0x170] sm:$0xff]
    %v640 = vld [vmem:[#allocation7 + $0x178] sm:$0xff]
    %641 = vmatpush.msra.mxu0 %v638
    %642 = vmatpush.msra.mxu0 %v635
    %643 = vmatpush.msra.mxu0 %v632
    %644 = vmatpush.msra.mxu0 %v629
    %645 = vmatpush.msra.mxu0 %v626
    %646 = vmatpush.msra.mxu0 %v623
    %647 = vmatpush.msra.mxu0 %v620
    %648 = vmatpush.msra.mxu0 %v617
    %649 = vmatpush.msra.mxu0 %v614
    %650 = vmatpush.msra.mxu0 %v611
    %651 = vmatpush.msra.mxu0 %v608
    %652 = vmatpush.msra.mxu0 %v605
    %653 = vmatpush.msra.mxu0 %v602
    %654 = vmatpush.msra.mxu0 %v599
    %655 = vmatpush.msra.mxu0 %v596
    %656 = vmatpush.msra.mxu0 %v593
    %657 = vmatmul.f32.gmra.mxu0 %v589
    %v658 = vpop.f32.mrf.mxu0
    %v659 = vadd.f32 0.0, %v658
    %660 = vmatmul.f32.gmra.mxu0 %v590
    %v661 = vpop.f32.mrf.mxu0
    %v662 = vadd.f32 0.0, %v661
    %663 = vmatmul.f32.gmra.mxu0 %v591
    %v664 = vpop.f32.mrf.mxu0
    %v665 = vadd.f32 0.0, %v664
    %666 = vmatmul.f32.gmra.mxu0 %v592
    %v667 = vpop.f32.mrf.mxu0
    %v668 = vadd.f32 0.0, %v667
    %669 = vdwg.mxu0
    %670 = vmatpush.msra.mxu0 %v639
    %671 = vmatpush.msra.mxu0 %v636
    %672 = vmatpush.msra.mxu0 %v633
    %673 = vmatpush.msra.mxu0 %v630
    %674 = vmatpush.msra.mxu0 %v627
    %675 = vmatpush.msra.mxu0 %v624
    %676 = vmatpush.msra.mxu0 %v621
    %677 = vmatpush.msra.mxu0 %v618
    %678 = vmatpush.msra.mxu0 %v615
    %679 = vmatpush.msra.mxu0 %v612
    %680 = vmatpush.msra.mxu0 %v609
    %681 = vmatpush.msra.mxu0 %v606
    %682 = vmatpush.msra.mxu0 %v603
    %683 = vmatpush.msra.mxu0 %v600
    %684 = vmatpush.msra.mxu0 %v597
    %685 = vmatpush.msra.mxu0 %v594
    %686 = vmatmul.f32.gmra.mxu0 %v589
    %v687 = vpop.f32.mrf.mxu0
    %v688 = vadd.f32 0.0, %v687
    %689 = vmatmul.f32.gmra.mxu0 %v590
    %v690 = vpop.f32.mrf.mxu0
    %v691 = vadd.f32 0.0, %v690
    %692 = vmatmul.f32.gmra.mxu0 %v591
    %v693 = vpop.f32.mrf.mxu0
    %v694 = vadd.f32 0.0, %v693
    %695 = vmatmul.f32.gmra.mxu0 %v592
    %v696 = vpop.f32.mrf.mxu0
    %v697 = vadd.f32 0.0, %v696
    %698 = vdwg.mxu0
    %699 = vmatpush.msra.mxu0 %v640
    %700 = vmatpush.msra.mxu0 %v637
    %701 = vmatpush.msra.mxu0 %v634
    %702 = vmatpush.msra.mxu0 %v631
    %703 = vmatpush.msra.mxu0 %v628
    %704 = vmatpush.msra.mxu0 %v625
    %705 = vmatpush.msra.mxu0 %v622
    %706 = vmatpush.msra.mxu0 %v619
    %707 = vmatpush.msra.mxu0 %v616
    %708 = vmatpush.msra.mxu0 %v613
    %709 = vmatpush.msra.mxu0 %v610
    %710 = vmatpush.msra.mxu0 %v607
    %711 = vmatpush.msra.mxu0 %v604
    %712 = vmatpush.msra.mxu0 %v601
    %713 = vmatpush.msra.mxu0 %v598
    %714 = vmatpush.msra.mxu0 %v595
    %715 = vmatmul.f32.gmra.mxu0 %v589
    %v716 = vpop.f32.mrf.mxu0
    %v717 = vadd.f32 0.0, %v716
    %718 = vmatmul.f32.gmra.mxu0 %v590
    %v719 = vpop.f32.mrf.mxu0
    %v720 = vadd.f32 0.0, %v719
    %721 = vmatmul.f32.gmra.mxu0 %v591
    %v722 = vpop.f32.mrf.mxu0
    %v723 = vadd.f32 0.0, %v722
    %724 = vmatmul.f32.gmra.mxu0 %v592
    %v725 = vpop.f32.mrf.mxu0
    %v726 = vadd.f32 0.0, %v725
    %727 = vdwg.mxu0
    %v728 = vrot.slane %v659, 7
    %v729 = vrot.slane %v662, 7
    %v730 = vrot.slane %v665, 7
    %v731 = vrot.slane %v668, 7
    %v732 = vsel %vm283, %v730, %v731
    %v733 = vsel %vm283, %v729, %v730
    %v734 = vsel %vm283, %v728, %v729
    %v735 = vsel %vm283, %v731, %v728
    %v736 = vmul.f32 %v139, %v735
    %v737 = vmul.f32 %v140, %v734
    %v738 = vmul.f32 %v141, %v733
    %v739 = vmul.f32 %v142, %v732
    %v740 = vrot.slane %v717, 1
    %v741 = vrot.slane %v720, 1
    %v742 = vrot.slane %v723, 1
    %v743 = vrot.slane %v726, 1
    %v744 = vsel %vm296, %v742, %v743
    %v745 = vsel %vm296, %v741, %v742
    %v746 = vsel %vm296, %v740, %v741
    %v747 = vsel %vm296, %v743, %v740
    %v748 = vmul.f32 %v151, %v746
    %v749 = vmul.f32 %v152, %v745
    %v750 = vmul.f32 %v153, %v744
    %v751 = vmul.f32 %v154, %v747
    %v752 = vadd.f32 %v688, %v736
    %v753 = vadd.f32 %v691, %v737
    %v754 = vadd.f32 %v694, %v738
    %v755 = vadd.f32 %v697, %v739
    %v756 = vadd.f32 %v752, %v748
    %v757 = vadd.f32 %v753, %v749
    %v758 = vadd.f32 %v754, %v750
    %v759 = vadd.f32 %v755, %v751
    %760 = vadd.xlane.f32.xlu0 %v756
    %v761 = vpop.xlane.xlu0 %760
    %762 = vadd.xlane.f32.xlu0 %v757
    %v763 = vpop.xlane.xlu0 %762
    %764 = vadd.xlane.f32.xlu0 %v758
    %v765 = vpop.xlane.xlu0 %764
    %766 = vadd.xlane.f32.xlu0 %v759
    %v767 = vpop.xlane.xlu0 %766
    %v768 = vadd.f32 %v761, %v763
    %v769 = vrot.slane %v768, 4
    %v770 = vadd.f32 %v768, %v769
    %v771 = vrot.slane %v770, 2
    %v772 = vadd.f32 %v770, %v771
    %v773 = vrot.slane %v772, 1
    %v774 = vadd.f32 %v772, %v773
    %v775 = vadd.f32 %v765, %v767
    %v776 = vrot.slane %v775, 4
    %v777 = vadd.f32 %v775, %v776
    %v778 = vrot.slane %v777, 2
    %v779 = vadd.f32 %v777, %v778
    %v780 = vrot.slane %v779, 1
    %v781 = vadd.f32 %v779, %v780
    %v782 = vmul.f32 %v756, %v756
    %v783 = vmul.f32 %v757, %v757
    %v784 = vmul.f32 %v758, %v758
    %v785 = vmul.f32 %v759, %v759
    %786 = vadd.xlane.f32.xlu0 %v782
    %v787 = vpop.xlane.xlu0 %786
    %788 = vadd.xlane.f32.xlu0 %v783
    %v789 = vpop.xlane.xlu0 %788
    %790 = vadd.xlane.f32.xlu0 %v784
    %v791 = vpop.xlane.xlu0 %790
    %792 = vadd.xlane.f32.xlu0 %v785
    %v793 = vpop.xlane.xlu0 %792
    %v794 = vadd.f32 %v787, %v789
    %v795 = vrot.slane %v794, 4
    %v796 = vadd.f32 %v794, %v795
    %v797 = vrot.slane %v796, 2
    %v798 = vadd.f32 %v796, %v797
    %v799 = vrot.slane %v798, 1
    %v800 = vadd.f32 %v798, %v799
    %v801 = vadd.f32 %v791, %v793
    %v802 = vrot.slane %v801, 4
    %v803 = vadd.f32 %v801, %v802
    %v804 = vrot.slane %v803, 2
    %v805 = vadd.f32 %v803, %v804
    %v806 = vrot.slane %v805, 1
    %v807 = vadd.f32 %v805, %v806
    %v808 = vmul.f32 %v774, 0.00048828125
    %v809 = vmul.f32 %v781, 0.00048828125
    %v810 = vmul.f32 %v800, 0.00048828125
    %v811 = vmul.f32 %v807, 0.00048828125
    %v812 = vmul.f32 %v808, %v808
    %v813 = vmul.f32 %v809, %v809
    %v814 = vsub.f32 %v810, %v812
    %v815 = vsub.f32 %v811, %v813
    %v816 = vmax.f32 %v814, 0.0
    %v817 = vmax.f32 %v815, 0.0
    %v818 = vsub.f32 %v756, %v808
    %v819 = vsub.f32 %v757, %v808
    %v820 = vsub.f32 %v758, %v809
    %v821 = vsub.f32 %v759, %v809
    %v822 = vadd.f32 %v816, 1e-05
    %v823 = vadd.f32 %v817, 1e-05
    %v824 = vrsqrt.pop %v822
    %v825 = vmul.f32 %v824, %v822
    %v826 = vmul.f32 %v825, %v824
    %v827 = vmul.f32 0.5, %v826
    %v828 = vsub.f32 1.5, %v827
    %v829 = vmul.f32 %v824, %v828
    %vm830 = vweird.f32 %v822
    %vm831 = vweird.f32 %v824
    %vm832 = vmor %vm830, %vm831
    %v833 = vsel %vm832, %v824, %v829
    %v834 = vrsqrt.pop %v823
    %v835 = vmul.f32 %v834, %v823
    %v836 = vmul.f32 %v835, %v834
    %v837 = vmul.f32 0.5, %v836
    %v838 = vsub.f32 1.5, %v837
    %v839 = vmul.f32 %v834, %v838
    %vm840 = vweird.f32 %v823
    %vm841 = vweird.f32 %v834
    %vm842 = vmor %vm840, %vm841
    %v843 = vsel %vm842, %v834, %v839
    %v844 = vmul.f32 %v818, %v833
    %v845 = vmul.f32 %v819, %v833
    %v846 = vmul.f32 %v820, %v843
    %v847 = vmul.f32 %v821, %v843
    %v848 = vld [vmem:[%s5] sm:$0x1]
    %v850 = vperm.slane %v848, 0
    %v852 = vmul.f32 %v844, %v850
    %v853 = vmul.f32 %v845, %v850
    %v854 = vmul.f32 %v846, %v850
    %v855 = vmul.f32 %v847, %v850
    %v856 = vld [vmem:[%s6] sm:$0x1]
    %v858 = vperm.slane %v856, 0
    %v860 = vadd.f32 %v852, %v858
    %v861 = vadd.f32 %v853, %v858
    %v862 = vadd.f32 %v854, %v858
    %v863 = vadd.f32 %v855, %v858
    %864 = vst [vmem:[#allocation8] sm:$0xff] %v860
    %865 = vst [vmem:[#allocation8 + $0x8] sm:$0xff] %v861
    %866 = vst [vmem:[#allocation8 + $0x10] sm:$0xff] %v862
    %867 = vst [vmem:[#allocation8 + $0x18] sm:$0xff] %v863
    // Predicated region
    $region42: #{tpu_custom_call.1} parent=1 // pred_check
      _
    $region43: #{tpu_custom_call.1} parent=1 // pred_check_branch
      %869 = sbr.rel (0) target = $region45
    $region44: #{tpu_custom_call.1} parent=1 // pred_region
      %871 = vsyncadd [#allocation4], 0
      %s872 = sshll.u32 [#allocation8], 4
      %s873 = int_to_ptr.vmem [resolvable:$true] %s872
      %s874 = sshll.u32 %s7, 4
      %s875 = int_to_ptr.hbm [resolvable:$true] %s874
      %880 = dma.vmem_to_hbm [thread:$0]  %s873, 512, %s875, [#allocation4], 128, 128, 8
    $region45: #{tpu_custom_call.1} parent=1 // pred_fallthru
      _
    // Predicated region
    $region46: #{tpu_custom_call.1} parent=1 // pred_check
      _
    $region47: #{tpu_custom_call.1} parent=1 // pred_check_branch
      %882 = sbr.rel (0) target = $region49
    $region48: #{tpu_custom_call.1} parent=1 // pred_region
      %884 = dma.done [#allocation4], 512
    $region49: #{tpu_custom_call.1} parent=1 // pred_fallthru
      _
    %885 = vsyncpa [#allocation3], 1
    %886 = vsyncpa [#allocation6], 1
    %887 = vsyncpa [#allocation4], 1

</llo_original>
